<compile_context>
chip_gen: v6e
topology: v6e:2x2x1
jax: 0.10.0
libtpu: 0.0.40
codegen_flags: <defaults>
</compile_context>

<pallas_src>
import jax
import jax.numpy as jnp
from jax.experimental import pallas as pl
from jax.experimental.pallas import tpu as pltpu

NEG_SLOPE = 0.01  # PyTorch LeakyReLU default
LANE = 128        # TPU lane width
SUBLANE = 8       # TPU sublane width


def _round_up(n, m):
    return ((n + m - 1) // m) * m


def _leaky_relu(h):
    return jnp.where(h > 0, h, NEG_SLOPE * h)


def _autoencoder_kernel(x_ref,
                        w1, b1, w2, b2, w3, b3, w4, b4,
                        w5, b5, w6, b6, w7, b7, w8, b8,
                        out_ref):
    """Full encode+decode for one batch tile. All (padded) weights live in VMEM."""

    def layer(h, w_ref, b_ref, activate):
        # MXU matmul in the weight dtype (f32 or bf16), accumulate in f32.
        y = jnp.dot(h.astype(w_ref.dtype), w_ref[...],
                    preferred_element_type=jnp.float32)
        y = y + b_ref[...]                      # bias add in f32 (bias is (1, out))
        return _leaky_relu(y) if activate else y

    h = x_ref[...]
    # ---- encoder ----
    h = layer(h, w1, b1, True)
    h = layer(h, w2, b2, True)
    h = layer(h, w3, b3, True)
    emb = layer(h, w4, b4, False)               # no activation on embedding
    # ---- decoder ----
    h = layer(emb, w5, b5, True)
    h = layer(h, w6, b6, True)
    h = layer(h, w7, b7, True)
    rec = layer(h, w8, b8, False)               # no activation on reconstruction

    out_ref[...] = rec.astype(out_ref.dtype)


def dipdeck_autoencoder_forward(x, params, *, batch_tile=256,
                                compute_dtype=jnp.float32):
    """Run the autoencoder forward pass with a Pallas TPU kernel.

    Args:
      x: [B, D] float array.
      params: list of 8 (W[in, out], b[out]) float32 tuples, encoder then decoder.
      batch_tile: rows per grid step (rounded to a multiple of 8). For large B
        keep B // batch_tile >= 2 so v7x's two TensorCores both get work.
      compute_dtype: dtype fed to the MXU (jnp.float32 or jnp.bfloat16).
        Accumulation, bias add and LeakyReLU are always float32.
    """
    B, D = x.shape
    out_dim = params[-1][0].shape[1]
    c_itemsize = jnp.dtype(compute_dtype).itemsize

    # ---- batch tiling (pad batch rows with zeros, sliced off afterwards) ----
    bt = _round_up(min(int(batch_tile), _round_up(B, SUBLANE)), SUBLANE)
    Bp = _round_up(B, bt)
    grid = (Bp // bt,)

    # ---- lane-pad every feature dimension to a multiple of 128 ----
    dims = [params[0][0].shape[0]] + [w.shape[1] for (w, _) in params]
    dims_p = [_round_up(d, LANE) for d in dims]

    x_p = jnp.pad(x, ((0, Bp - B), (0, dims_p[0] - D))).astype(compute_dtype)

    flat_args = []
    in_specs = [pl.BlockSpec((bt, dims_p[0]), lambda i: (i, 0))]  # x tile
    for li, (w, b) in enumerate(params):
        din, dout = w.shape
        w_p = jnp.pad(w, ((0, dims_p[li] - din), (0, dims_p[li + 1] - dout)))
        w_p = w_p.astype(compute_dtype)
        b_p = jnp.pad(b, (0, dims_p[li + 1] - dout)).astype(jnp.float32)
        b_p = b_p.reshape(1, -1)
        flat_args.append(w_p)
        in_specs.append(pl.BlockSpec(w_p.shape, lambda i: (0, 0)))
        flat_args.append(b_p)
        in_specs.append(pl.BlockSpec(b_p.shape, lambda i: (0, 0)))

    out_dim_p = dims_p[-1]

    # ---- explicit VMEM budget (documents tile footprint; honest on v7x 64 MiB) ----
    x_bytes = 2 * bt * dims_p[0] * c_itemsize                 # double-buffered x tile
    out_bytes = 2 * bt * out_dim_p * 4                        # double-buffered out tile
    wb_bytes = sum(2 * (dims_p[i] * dims_p[i + 1] * c_itemsize + dims_p[i + 1] * 4)
                   for i in range(8))                         # weights + biases
    act_bytes = 4 * bt * max(dims_p) * 4                      # live f32 activations
    vmem_limit = min(max(x_bytes + out_bytes + wb_bytes + act_bytes + (4 << 20),
                         16 << 20), 64 << 20)

    out_p = pl.pallas_call(
        _autoencoder_kernel,
        out_shape=jax.ShapeDtypeStruct((Bp, out_dim_p), x.dtype),
        grid_spec=pltpu.PrefetchScalarGridSpec(
            num_scalar_prefetch=0,
            grid=grid,
            in_specs=in_specs,
            out_specs=pl.BlockSpec((bt, out_dim_p), lambda i: (i, 0)),
        ),
        compiler_params=pltpu.CompilerParams(
            dimension_semantics=("parallel",),
            vmem_limit_bytes=vmem_limit,
        ),
    )(x_p, *flat_args)

    return out_p[:B, :out_dim]


def init_params(key, input_dim, inter_dim, embedding_size):
    """Deterministic init mirroring torch.nn.Linear shapes (weights stored as
    [in, out], i.e. the transpose of PyTorch's [out, in])."""
    dims = [input_dim, inter_dim[0], inter_dim[1], inter_dim[2], embedding_size,
            inter_dim[2], inter_dim[1], inter_dim[0], input_dim]
    params = []
    for i in range(8):
        fan_in, fan_out = dims[i], dims[i + 1]
        key, kw, kb = jax.random.split(key, 3)
        bound = 1.0 / jnp.sqrt(fan_in)
        w = jax.random.uniform(kw, (fan_in, fan_out), jnp.float32, -bound, bound)
        b = jax.random.uniform(kb, (fan_out,), jnp.float32, -bound, bound)
        params.append((w, b))
    return params


def reference_forward(x, params):
    """Plain-JAX reference of the same forward pass (float32)."""
    h = x
    for idx, (w, b) in enumerate(params):
        h = h @ w + b
        if idx not in (3, 7):  # no activation after embedding / final layer
            h = _leaky_relu(h)
    return h


if __name__ == "__main__":
    input_dim = 64
    inter_dim = [128, 64, 32]
    embedding_size = 16
    batch = 16

    key = jax.random.PRNGKey(0)
    kx, kp = jax.random.split(key)
    x = jax.random.normal(kx, (batch, input_dim), jnp.float32)
    params = init_params(kp, input_dim, inter_dim, embedding_size)

    ref = reference_forward(x, params)

    # f32 path: exact (bit-for-bit matmul semantics aside) vs. reference.
    out_f32 = dipdeck_autoencoder_forward(x, params, batch_tile=256,
                                          compute_dtype=jnp.float32)
    out_f32 = jax.block_until_ready(out_f32)
    assert out_f32.shape == (batch, input_dim)
    assert jnp.allclose(out_f32, ref, atol=1e-5, rtol=1e-5), "f32 mismatch vs reference"

    # bf16-matmul path (v6e/v7x MXU fast path): f32 accumulation, relaxed tolerance.
    out_bf16 = dipdeck_autoencoder_forward(x, params, batch_tile=256,
                                           compute_dtype=jnp.bfloat16)
    out_bf16 = jax.block_until_ready(out_bf16)
    assert out_bf16.shape == (batch, input_dim)
    assert jnp.allclose(out_bf16, ref, atol=1e-1, rtol=1e-1), "bf16 mismatch vs reference"

    print("KERNEL_OK")
</pallas_src>

<mosaic_0001>
module attributes {stable_mosaic.version = 11 : i64} {
  func.func @_autoencoder_kernel(%arg0: i32, %arg1: memref<16x128xf32, #tpu.memory_space<vmem>>, %arg2: memref<128x128xf32, #tpu.memory_space<vmem>>, %arg3: memref<1x128xf32, #tpu.memory_space<vmem>>, %arg4: memref<128x128xf32, #tpu.memory_space<vmem>>, %arg5: memref<1x128xf32, #tpu.memory_space<vmem>>, %arg6: memref<128x128xf32, #tpu.memory_space<vmem>>, %arg7: memref<1x128xf32, #tpu.memory_space<vmem>>, %arg8: memref<128x128xf32, #tpu.memory_space<vmem>>, %arg9: memref<1x128xf32, #tpu.memory_space<vmem>>, %arg10: memref<128x128xf32, #tpu.memory_space<vmem>>, %arg11: memref<1x128xf32, #tpu.memory_space<vmem>>, %arg12: memref<128x128xf32, #tpu.memory_space<vmem>>, %arg13: memref<1x128xf32, #tpu.memory_space<vmem>>, %arg14: memref<128x128xf32, #tpu.memory_space<vmem>>, %arg15: memref<1x128xf32, #tpu.memory_space<vmem>>, %arg16: memref<128x128xf32, #tpu.memory_space<vmem>>, %arg17: memref<1x128xf32, #tpu.memory_space<vmem>>, %arg18: memref<16x128xf32, #tpu.memory_space<vmem>>) attributes {dimension_semantics = [#tpu.dimension_semantics<parallel>], iteration_bounds = array<i64: 1>, scalar_prefetch = 0 : i64, scratch_operands = 0 : i64, tpu.core_type = #tpu.core_type<tc>, window_params = [{transform_indices = @transform_0, window_bounds = array<i64: 16, 128>}, {pipeline_mode = #tpu.pipeline_mode<synchronous>, transform_indices = @transform_1, window_bounds = array<i64: 128, 128>}, {pipeline_mode = #tpu.pipeline_mode<synchronous>, transform_indices = @transform_2, window_bounds = array<i64: 1, 128>}, {pipeline_mode = #tpu.pipeline_mode<synchronous>, transform_indices = @transform_3, window_bounds = array<i64: 128, 128>}, {pipeline_mode = #tpu.pipeline_mode<synchronous>, transform_indices = @transform_4, window_bounds = array<i64: 1, 128>}, {pipeline_mode = #tpu.pipeline_mode<synchronous>, transform_indices = @transform_5, window_bounds = array<i64: 128, 128>}, {pipeline_mode = #tpu.pipeline_mode<synchronous>, transform_indices = @transform_6, window_bounds = array<i64: 1, 128>}, {pipeline_mode = #tpu.pipeline_mode<synchronous>, transform_indices = @transform_7, window_bounds = array<i64: 128, 128>}, {pipeline_mode = #tpu.pipeline_mode<synchronous>, transform_indices = @transform_8, window_bounds = array<i64: 1, 128>}, {pipeline_mode = #tpu.pipeline_mode<synchronous>, transform_indices = @transform_9, window_bounds = array<i64: 128, 128>}, {pipeline_mode = #tpu.pipeline_mode<synchronous>, transform_indices = @transform_10, window_bounds = array<i64: 1, 128>}, {pipeline_mode = #tpu.pipeline_mode<synchronous>, transform_indices = @transform_11, window_bounds = array<i64: 128, 128>}, {pipeline_mode = #tpu.pipeline_mode<synchronous>, transform_indices = @transform_12, window_bounds = array<i64: 1, 128>}, {pipeline_mode = #tpu.pipeline_mode<synchronous>, transform_indices = @transform_13, window_bounds = array<i64: 128, 128>}, {pipeline_mode = #tpu.pipeline_mode<synchronous>, transform_indices = @transform_14, window_bounds = array<i64: 1, 128>}, {pipeline_mode = #tpu.pipeline_mode<synchronous>, transform_indices = @transform_15, window_bounds = array<i64: 128, 128>}, {pipeline_mode = #tpu.pipeline_mode<synchronous>, transform_indices = @transform_16, window_bounds = array<i64: 1, 128>}, {transform_indices = @transform_17, window_bounds = array<i64: 16, 128>}]} {
    %c0 = arith.constant 0 : index
    %c0_0 = arith.constant 0 : index
    %0 = vector.load %arg1[%c0, %c0_0] : memref<16x128xf32, #tpu.memory_space<vmem>>, vector<16x128xf32>
    %c0_1 = arith.constant 0 : index
    %c0_2 = arith.constant 0 : index
    %1 = vector.load %arg2[%c0_1, %c0_2] : memref<128x128xf32, #tpu.memory_space<vmem>>, vector<128x128xf32>
    %cst = arith.constant dense<0.000000e+00> : vector<16x128xf32>
    %2 = tpu.matmul %0, %1, %cst {dimension_numbers = #tpu.dot_dimension_numbers<[1], [0], [0], [1], [0, 0, 1, 1], [], []>} : vector<16x128xf32>, vector<128x128xf32>, vector<16x128xf32> -> vector<16x128xf32>
    %c0_3 = arith.constant 0 : index
    %c0_4 = arith.constant 0 : index
    %3 = vector.load %arg3[%c0_3, %c0_4] : memref<1x128xf32, #tpu.memory_space<vmem>>, vector<1x128xf32>
    %4 = vector.broadcast %3 : vector<1x128xf32> to vector<16x128xf32>
    %5 = arith.addf %2, %4 : vector<16x128xf32>
    %cst_5 = arith.constant 0.000000e+00 : f32
    %6 = vector.broadcast %cst_5 : f32 to vector<16x128xf32>
    %7 = arith.cmpf ogt, %5, %6 : vector<16x128xf32>
    %cst_6 = arith.constant 0.00999999977 : f32
    %8 = vector.broadcast %cst_6 : f32 to vector<16x128xf32>
    %9 = arith.mulf %8, %5 : vector<16x128xf32>
    %10 = arith.select %7, %5, %9 : vector<16x128xi1>, vector<16x128xf32>
    %c0_7 = arith.constant 0 : index
    %c0_8 = arith.constant 0 : index
    %11 = vector.load %arg4[%c0_7, %c0_8] : memref<128x128xf32, #tpu.memory_space<vmem>>, vector<128x128xf32>
    %cst_9 = arith.constant dense<0.000000e+00> : vector<16x128xf32>
    %12 = tpu.matmul %10, %11, %cst_9 {dimension_numbers = #tpu.dot_dimension_numbers<[1], [0], [0], [1], [0, 0, 1, 1], [], []>} : vector<16x128xf32>, vector<128x128xf32>, vector<16x128xf32> -> vector<16x128xf32>
    %c0_10 = arith.constant 0 : index
    %c0_11 = arith.constant 0 : index
    %13 = vector.load %arg5[%c0_10, %c0_11] : memref<1x128xf32, #tpu.memory_space<vmem>>, vector<1x128xf32>
    %14 = vector.broadcast %13 : vector<1x128xf32> to vector<16x128xf32>
    %15 = arith.addf %12, %14 : vector<16x128xf32>
    %cst_12 = arith.constant 0.000000e+00 : f32
    %16 = vector.broadcast %cst_12 : f32 to vector<16x128xf32>
    %17 = arith.cmpf ogt, %15, %16 : vector<16x128xf32>
    %cst_13 = arith.constant 0.00999999977 : f32
    %18 = vector.broadcast %cst_13 : f32 to vector<16x128xf32>
    %19 = arith.mulf %18, %15 : vector<16x128xf32>
    %20 = arith.select %17, %15, %19 : vector<16x128xi1>, vector<16x128xf32>
    %c0_14 = arith.constant 0 : index
    %c0_15 = arith.constant 0 : index
    %21 = vector.load %arg6[%c0_14, %c0_15] : memref<128x128xf32, #tpu.memory_space<vmem>>, vector<128x128xf32>
    %cst_16 = arith.constant dense<0.000000e+00> : vector<16x128xf32>
    %22 = tpu.matmul %20, %21, %cst_16 {dimension_numbers = #tpu.dot_dimension_numbers<[1], [0], [0], [1], [0, 0, 1, 1], [], []>} : vector<16x128xf32>, vector<128x128xf32>, vector<16x128xf32> -> vector<16x128xf32>
    %c0_17 = arith.constant 0 : index
    %c0_18 = arith.constant 0 : index
    %23 = vector.load %arg7[%c0_17, %c0_18] : memref<1x128xf32, #tpu.memory_space<vmem>>, vector<1x128xf32>
    %24 = vector.broadcast %23 : vector<1x128xf32> to vector<16x128xf32>
    %25 = arith.addf %22, %24 : vector<16x128xf32>
    %cst_19 = arith.constant 0.000000e+00 : f32
    %26 = vector.broadcast %cst_19 : f32 to vector<16x128xf32>
    %27 = arith.cmpf ogt, %25, %26 : vector<16x128xf32>
    %cst_20 = arith.constant 0.00999999977 : f32
    %28 = vector.broadcast %cst_20 : f32 to vector<16x128xf32>
    %29 = arith.mulf %28, %25 : vector<16x128xf32>
    %30 = arith.select %27, %25, %29 : vector<16x128xi1>, vector<16x128xf32>
    %c0_21 = arith.constant 0 : index
    %c0_22 = arith.constant 0 : index
    %31 = vector.load %arg8[%c0_21, %c0_22] : memref<128x128xf32, #tpu.memory_space<vmem>>, vector<128x128xf32>
    %cst_23 = arith.constant dense<0.000000e+00> : vector<16x128xf32>
    %32 = tpu.matmul %30, %31, %cst_23 {dimension_numbers = #tpu.dot_dimension_numbers<[1], [0], [0], [1], [0, 0, 1, 1], [], []>} : vector<16x128xf32>, vector<128x128xf32>, vector<16x128xf32> -> vector<16x128xf32>
    %c0_24 = arith.constant 0 : index
    %c0_25 = arith.constant 0 : index
    %33 = vector.load %arg9[%c0_24, %c0_25] : memref<1x128xf32, #tpu.memory_space<vmem>>, vector<1x128xf32>
    %34 = vector.broadcast %33 : vector<1x128xf32> to vector<16x128xf32>
    %35 = arith.addf %32, %34 : vector<16x128xf32>
    %c0_26 = arith.constant 0 : index
    %c0_27 = arith.constant 0 : index
    %36 = vector.load %arg10[%c0_26, %c0_27] : memref<128x128xf32, #tpu.memory_space<vmem>>, vector<128x128xf32>
    %cst_28 = arith.constant dense<0.000000e+00> : vector<16x128xf32>
    %37 = tpu.matmul %35, %36, %cst_28 {dimension_numbers = #tpu.dot_dimension_numbers<[1], [0], [0], [1], [0, 0, 1, 1], [], []>} : vector<16x128xf32>, vector<128x128xf32>, vector<16x128xf32> -> vector<16x128xf32>
    %c0_29 = arith.constant 0 : index
    %c0_30 = arith.constant 0 : index
    %38 = vector.load %arg11[%c0_29, %c0_30] : memref<1x128xf32, #tpu.memory_space<vmem>>, vector<1x128xf32>
    %39 = vector.broadcast %38 : vector<1x128xf32> to vector<16x128xf32>
    %40 = arith.addf %37, %39 : vector<16x128xf32>
    %cst_31 = arith.constant 0.000000e+00 : f32
    %41 = vector.broadcast %cst_31 : f32 to vector<16x128xf32>
    %42 = arith.cmpf ogt, %40, %41 : vector<16x128xf32>
    %cst_32 = arith.constant 0.00999999977 : f32
    %43 = vector.broadcast %cst_32 : f32 to vector<16x128xf32>
    %44 = arith.mulf %43, %40 : vector<16x128xf32>
    %45 = arith.select %42, %40, %44 : vector<16x128xi1>, vector<16x128xf32>
    %c0_33 = arith.constant 0 : index
    %c0_34 = arith.constant 0 : index
    %46 = vector.load %arg12[%c0_33, %c0_34] : memref<128x128xf32, #tpu.memory_space<vmem>>, vector<128x128xf32>
    %cst_35 = arith.constant dense<0.000000e+00> : vector<16x128xf32>
    %47 = tpu.matmul %45, %46, %cst_35 {dimension_numbers = #tpu.dot_dimension_numbers<[1], [0], [0], [1], [0, 0, 1, 1], [], []>} : vector<16x128xf32>, vector<128x128xf32>, vector<16x128xf32> -> vector<16x128xf32>
    %c0_36 = arith.constant 0 : index
    %c0_37 = arith.constant 0 : index
    %48 = vector.load %arg13[%c0_36, %c0_37] : memref<1x128xf32, #tpu.memory_space<vmem>>, vector<1x128xf32>
    %49 = vector.broadcast %48 : vector<1x128xf32> to vector<16x128xf32>
    %50 = arith.addf %47, %49 : vector<16x128xf32>
    %cst_38 = arith.constant 0.000000e+00 : f32
    %51 = vector.broadcast %cst_38 : f32 to vector<16x128xf32>
    %52 = arith.cmpf ogt, %50, %51 : vector<16x128xf32>
    %cst_39 = arith.constant 0.00999999977 : f32
    %53 = vector.broadcast %cst_39 : f32 to vector<16x128xf32>
    %54 = arith.mulf %53, %50 : vector<16x128xf32>
    %55 = arith.select %52, %50, %54 : vector<16x128xi1>, vector<16x128xf32>
    %c0_40 = arith.constant 0 : index
    %c0_41 = arith.constant 0 : index
    %56 = vector.load %arg14[%c0_40, %c0_41] : memref<128x128xf32, #tpu.memory_space<vmem>>, vector<128x128xf32>
    %cst_42 = arith.constant dense<0.000000e+00> : vector<16x128xf32>
    %57 = tpu.matmul %55, %56, %cst_42 {dimension_numbers = #tpu.dot_dimension_numbers<[1], [0], [0], [1], [0, 0, 1, 1], [], []>} : vector<16x128xf32>, vector<128x128xf32>, vector<16x128xf32> -> vector<16x128xf32>
    %c0_43 = arith.constant 0 : index
    %c0_44 = arith.constant 0 : index
    %58 = vector.load %arg15[%c0_43, %c0_44] : memref<1x128xf32, #tpu.memory_space<vmem>>, vector<1x128xf32>
    %59 = vector.broadcast %58 : vector<1x128xf32> to vector<16x128xf32>
    %60 = arith.addf %57, %59 : vector<16x128xf32>
    %cst_45 = arith.constant 0.000000e+00 : f32
    %61 = vector.broadcast %cst_45 : f32 to vector<16x128xf32>
    %62 = arith.cmpf ogt, %60, %61 : vector<16x128xf32>
    %cst_46 = arith.constant 0.00999999977 : f32
    %63 = vector.broadcast %cst_46 : f32 to vector<16x128xf32>
    %64 = arith.mulf %63, %60 : vector<16x128xf32>
    %65 = arith.select %62, %60, %64 : vector<16x128xi1>, vector<16x128xf32>
    %c0_47 = arith.constant 0 : index
    %c0_48 = arith.constant 0 : index
    %66 = vector.load %arg16[%c0_47, %c0_48] : memref<128x128xf32, #tpu.memory_space<vmem>>, vector<128x128xf32>
    %cst_49 = arith.constant dense<0.000000e+00> : vector<16x128xf32>
    %67 = tpu.matmul %65, %66, %cst_49 {dimension_numbers = #tpu.dot_dimension_numbers<[1], [0], [0], [1], [0, 0, 1, 1], [], []>} : vector<16x128xf32>, vector<128x128xf32>, vector<16x128xf32> -> vector<16x128xf32>
    %c0_50 = arith.constant 0 : index
    %c0_51 = arith.constant 0 : index
    %68 = vector.load %arg17[%c0_50, %c0_51] : memref<1x128xf32, #tpu.memory_space<vmem>>, vector<1x128xf32>
    %69 = vector.broadcast %68 : vector<1x128xf32> to vector<16x128xf32>
    %70 = arith.addf %67, %69 : vector<16x128xf32>
    %c0_52 = arith.constant 0 : index
    %c0_53 = arith.constant 0 : index
    %71 = vector.load %arg18[%c0_52, %c0_53] : memref<16x128xf32, #tpu.memory_space<vmem>>, vector<16x128xf32>
    tpu.vector_store %arg18[%c0_52, %c0_53], %70 {strides = array<i32>} : memref<16x128xf32, #tpu.memory_space<vmem>>, vector<16x128xf32>,
    return
  }
  func.func @transform_0(%arg0: i32) -> (i32, i32) {
    %c0_i32 = arith.constant 0 : i32
    %c0_i32_0 = arith.constant 0 : i32
    return %arg0, %c0_i32 : i32, i32
  }
  func.func @transform_1(%arg0: i32) -> (i32, i32) {
    %c0_i32 = arith.constant 0 : i32
    %c0_i32_0 = arith.constant 0 : i32
    %c0_i32_1 = arith.constant 0 : i32
    return %c0_i32, %c0_i32_0 : i32, i32
  }
  func.func @transform_2(%arg0: i32) -> (i32, i32) {
    %c0_i32 = arith.constant 0 : i32
    %c0_i32_0 = arith.constant 0 : i32
    %c0_i32_1 = arith.constant 0 : i32
    return %c0_i32, %c0_i32_0 : i32, i32
  }
  func.func @transform_3(%arg0: i32) -> (i32, i32) {
    %c0_i32 = arith.constant 0 : i32
    %c0_i32_0 = arith.constant 0 : i32
    %c0_i32_1 = arith.constant 0 : i32
    return %c0_i32, %c0_i32_0 : i32, i32
  }
  func.func @transform_4(%arg0: i32) -> (i32, i32) {
    %c0_i32 = arith.constant 0 : i32
    %c0_i32_0 = arith.constant 0 : i32
    %c0_i32_1 = arith.constant 0 : i32
    return %c0_i32, %c0_i32_0 : i32, i32
  }
  func.func @transform_5(%arg0: i32) -> (i32, i32) {
    %c0_i32 = arith.constant 0 : i32
    %c0_i32_0 = arith.constant 0 : i32
    %c0_i32_1 = arith.constant 0 : i32
    return %c0_i32, %c0_i32_0 : i32, i32
  }
  func.func @transform_6(%arg0: i32) -> (i32, i32) {
    %c0_i32 = arith.constant 0 : i32
    %c0_i32_0 = arith.constant 0 : i32
    %c0_i32_1 = arith.constant 0 : i32
    return %c0_i32, %c0_i32_0 : i32, i32
  }
  func.func @transform_7(%arg0: i32) -> (i32, i32) {
    %c0_i32 = arith.constant 0 : i32
    %c0_i32_0 = arith.constant 0 : i32
    %c0_i32_1 = arith.constant 0 : i32
    return %c0_i32, %c0_i32_0 : i32, i32
  }
  func.func @transform_8(%arg0: i32) -> (i32, i32) {
    %c0_i32 = arith.constant 0 : i32
    %c0_i32_0 = arith.constant 0 : i32
    %c0_i32_1 = arith.constant 0 : i32
    return %c0_i32, %c0_i32_0 : i32, i32
  }
  func.func @transform_9(%arg0: i32) -> (i32, i32) {
    %c0_i32 = arith.constant 0 : i32
    %c0_i32_0 = arith.constant 0 : i32
    %c0_i32_1 = arith.constant 0 : i32
    return %c0_i32, %c0_i32_0 : i32, i32
  }
  func.func @transform_10(%arg0: i32) -> (i32, i32) {
    %c0_i32 = arith.constant 0 : i32
    %c0_i32_0 = arith.constant 0 : i32
    %c0_i32_1 = arith.constant 0 : i32
    return %c0_i32, %c0_i32_0 : i32, i32
  }
  func.func @transform_11(%arg0: i32) -> (i32, i32) {
    %c0_i32 = arith.constant 0 : i32
    %c0_i32_0 = arith.constant 0 : i32
    %c0_i32_1 = arith.constant 0 : i32
    return %c0_i32, %c0_i32_0 : i32, i32
  }
  func.func @transform_12(%arg0: i32) -> (i32, i32) {
    %c0_i32 = arith.constant 0 : i32
    %c0_i32_0 = arith.constant 0 : i32
    %c0_i32_1 = arith.constant 0 : i32
    return %c0_i32, %c0_i32_0 : i32, i32
  }
  func.func @transform_13(%arg0: i32) -> (i32, i32) {
    %c0_i32 = arith.constant 0 : i32
    %c0_i32_0 = arith.constant 0 : i32
    %c0_i32_1 = arith.constant 0 : i32
    return %c0_i32, %c0_i32_0 : i32, i32
  }
  func.func @transform_14(%arg0: i32) -> (i32, i32) {
    %c0_i32 = arith.constant 0 : i32
    %c0_i32_0 = arith.constant 0 : i32
    %c0_i32_1 = arith.constant 0 : i32
    return %c0_i32, %c0_i32_0 : i32, i32
  }
  func.func @transform_15(%arg0: i32) -> (i32, i32) {
    %c0_i32 = arith.constant 0 : i32
    %c0_i32_0 = arith.constant 0 : i32
    %c0_i32_1 = arith.constant 0 : i32
    return %c0_i32, %c0_i32_0 : i32, i32
  }
  func.func @transform_16(%arg0: i32) -> (i32, i32) {
    %c0_i32 = arith.constant 0 : i32
    %c0_i32_0 = arith.constant 0 : i32
    %c0_i32_1 = arith.constant 0 : i32
    return %c0_i32, %c0_i32_0 : i32, i32
  }
  func.func @transform_17(%arg0: i32) -> (i32, i32) {
    %c0_i32 = arith.constant 0 : i32
    %c0_i32_0 = arith.constant 0 : i32
    return %arg0, %c0_i32 : i32, i32
  }
}

</mosaic_0001>

<llo_original>
// kernel: tpu_custom_call.1
$region0: #{tpu_custom_call.1}
  #allocation0 [shape = 'u32[]', space=smem, size = 0x4, offset = 0x4, fixed_abs, tag = 'smem constant byte address 0x4 - core index']
  #allocation1 [shape = 'u32[144,128]{1,0:T(1,128)}', space=vmem, size = 0x12000, scoped, tag = 'internal scratch']
  %s0 = inlined_call_operand.hbm [shape: f32[16,128], index: 0, kind: input, shape index: {}]
  %s1 = inlined_call_operand.hbm [shape: f32[128,128], index: 1, kind: input, shape index: {}]
  %s2 = inlined_call_operand.vmem [shape: f32[1,128], index: 2, kind: input, shape index: {}]
  %s3 = inlined_call_operand.hbm [shape: f32[128,128], index: 3, kind: input, shape index: {}]
  %s4 = inlined_call_operand.vmem [shape: f32[1,128], index: 4, kind: input, shape index: {}]
  %s5 = inlined_call_operand.hbm [shape: f32[128,128], index: 5, kind: input, shape index: {}]
  %s6 = inlined_call_operand.vmem [shape: f32[1,128], index: 6, kind: input, shape index: {}]
  %s7 = inlined_call_operand.hbm [shape: f32[128,128], index: 7, kind: input, shape index: {}]
  %s8 = inlined_call_operand.vmem [shape: f32[1,128], index: 8, kind: input, shape index: {}]
  %s9 = inlined_call_operand.hbm [shape: f32[128,128], index: 9, kind: input, shape index: {}]
  %s10 = inlined_call_operand.vmem [shape: f32[1,128], index: 10, kind: input, shape index: {}]
  %s11 = inlined_call_operand.hbm [shape: f32[128,128], index: 11, kind: input, shape index: {}]
  %s12 = inlined_call_operand.vmem [shape: f32[1,128], index: 12, kind: input, shape index: {}]
  %s13 = inlined_call_operand.hbm [shape: f32[128,128], index: 13, kind: input, shape index: {}]
  %s14 = inlined_call_operand.vmem [shape: f32[1,128], index: 14, kind: input, shape index: {}]
  %s15 = inlined_call_operand.hbm [shape: f32[128,128], index: 15, kind: input, shape index: {}]
  %s16 = inlined_call_operand.vmem [shape: f32[1,128], index: 16, kind: input, shape index: {}]
  %s17 = inlined_call_operand.hbm [shape: f32[16,128], index: 17, kind: output, shape index: {}]
  %s18 = sld [smem:[#allocation0]]
  $region114: #{tpu_custom_call.1} parent=0
    _
  %s20 = ssub.s32 1, %s18
  %s21 = scalar_select 0, %s20, %s18
  $region1: #{tpu_custom_call.1} parent=0
    #allocation2 [shape = 'u8[8192]{0}', space=vmem, size = 0x2000, scoped, tag = 'input window, operand 0, single buffered']
    #allocation3 [shape = 's32[1]{0}', space=sflag, size = 0x4, scoped, tag = 'scoped memory for tpu_custom_call.1']
    #allocation4 [shape = 's32[1]{0}', space=sflag, size = 0x4, scoped, tag = 'scoped memory for tpu_custom_call.1']
    #allocation5 [shape = 'u8[65536]{0}', space=vmem, size = 0x10000, scoped, tag = 'input window, operand 1, single buffered']
    #allocation6 [shape = 's32[1]{0}', space=sflag, size = 0x4, scoped, tag = 'scoped memory for tpu_custom_call.1']
    #allocation7 [shape = 'u8[65536]{0}', space=vmem, size = 0x10000, scoped, tag = 'input window, operand 3, single buffered']
    #allocation8 [shape = 'u8[65536]{0}', space=vmem, size = 0x10000, scoped, tag = 'input window, operand 5, single buffered']
    #allocation9 [shape = 's32[1]{0}', space=sflag, size = 0x4, scoped, tag = 'scoped memory for tpu_custom_call.1']
    #allocation10 [shape = 'u8[65536]{0}', space=vmem, size = 0x10000, scoped, tag = 'input window, operand 7, single buffered']
    #allocation11 [shape = 'u8[65536]{0}', space=vmem, size = 0x10000, scoped, tag = 'input window, operand 9, single buffered']
    #allocation12 [shape = 's32[1]{0}', space=sflag, size = 0x4, scoped, tag = 'scoped memory for tpu_custom_call.1']
    #allocation13 [shape = 'u8[65536]{0}', space=vmem, size = 0x10000, scoped, tag = 'input window, operand 11, single buffered']
    #allocation14 [shape = 'u8[65536]{0}', space=vmem, size = 0x10000, scoped, tag = 'input window, operand 13, single buffered']
    #allocation15 [shape = 's32[1]{0}', space=sflag, size = 0x4, scoped, tag = 'scoped memory for tpu_custom_call.1']
    #allocation16 [shape = 'u8[65536]{0}', space=vmem, size = 0x10000, scoped, tag = 'input window, operand 15, single buffered']
    #allocation17 [shape = 'u8[8192]{0}', space=vmem, size = 0x2000, scoped, tag = 'output window, operand 0, single buffered']
    %22 = vsyncpa [#allocation3], 0
    %23 = vsyncpa [#allocation6], 0
    %24 = vsyncpa [#allocation9], 0
    %25 = vsyncpa [#allocation12], 0
    %26 = vsyncpa [#allocation15], 0
    %27 = vsyncpa [#allocation4], 0
    // Predicated region
    $region2: #{tpu_custom_call.1} parent=1 // pred_check
      _
    $region3: #{tpu_custom_call.1} parent=1 // pred_check_branch
      %29 = sbr.rel (0) target = $region5
    $region4: #{tpu_custom_call.1} parent=1 // pred_region
      %s31 = ssub.s32 256, 256
      %32 = vsyncadd [#allocation3], %s31
      %s33 = sshll.u32 [#allocation2], 4
      %s34 = int_to_ptr.vmem [resolvable:$true] %s33
      %39 = dma.hbm_to_vmem [thread:$0]  %s0, 256, %s34, [#allocation3], 128, 128, 8
    $region5: #{tpu_custom_call.1} parent=1 // pred_fallthru
      _
    // Predicated region
    $region6: #{tpu_custom_call.1} parent=1 // pred_check
      _
    $region7: #{tpu_custom_call.1} parent=1 // pred_check_branch
      %41 = sbr.rel (0) target = $region9
    $region8: #{tpu_custom_call.1} parent=1 // pred_region
      %s43 = ssub.s32 2048, 2048
      %44 = vsyncadd [#allocation6], %s43
      %s45 = sshll.u32 [#allocation5], 4
      %s46 = int_to_ptr.vmem [resolvable:$true] %s45
      %51 = dma.hbm_to_vmem [thread:$0]  %s1, 2048, %s46, [#allocation6], 128, 128, 8
    $region9: #{tpu_custom_call.1} parent=1 // pred_fallthru
      _
    // Predicated region
    $region10: #{tpu_custom_call.1} parent=1 // pred_check
      _
    $region11: #{tpu_custom_call.1} parent=1 // pred_check_branch
      %53 = sbr.rel (0) target = $region13
    $region12: #{tpu_custom_call.1} parent=1 // pred_region
      _
    $region13: #{tpu_custom_call.1} parent=1 // pred_fallthru
      _
    // Predicated region
    $region14: #{tpu_custom_call.1} parent=1 // pred_check
      _
    $region15: #{tpu_custom_call.1} parent=1 // pred_check_branch
      %55 = sbr.rel (0) target = $region17
    $region16: #{tpu_custom_call.1} parent=1 // pred_region
      %s57 = ssub.s32 2048, 2048
      %58 = vsyncadd [#allocation6], %s57
      %s59 = sshll.u32 [#allocation7], 4
      %s60 = int_to_ptr.vmem [resolvable:$true] %s59
      %65 = dma.hbm_to_vmem [thread:$0]  %s3, 2048, %s60, [#allocation6], 128, 128, 8
    $region17: #{tpu_custom_call.1} parent=1 // pred_fallthru
      _
    // Predicated region
    $region18: #{tpu_custom_call.1} parent=1 // pred_check
      _
    $region19: #{tpu_custom_call.1} parent=1 // pred_check_branch
      %67 = sbr.rel (0) target = $region21
    $region20: #{tpu_custom_call.1} parent=1 // pred_region
      _
    $region21: #{tpu_custom_call.1} parent=1 // pred_fallthru
      _
    // Predicated region
    $region22: #{tpu_custom_call.1} parent=1 // pred_check
      _
    $region23: #{tpu_custom_call.1} parent=1 // pred_check_branch
      %69 = sbr.rel (0) target = $region25
    $region24: #{tpu_custom_call.1} parent=1 // pred_region
      %s71 = ssub.s32 2048, 2048
      %72 = vsyncadd [#allocation9], %s71
      %s73 = sshll.u32 [#allocation8], 4
      %s74 = int_to_ptr.vmem [resolvable:$true] %s73
      %79 = dma.hbm_to_vmem [thread:$0]  %s5, 2048, %s74, [#allocation9], 128, 128, 8
    $region25: #{tpu_custom_call.1} parent=1 // pred_fallthru
      _
    // Predicated region
    $region26: #{tpu_custom_call.1} parent=1 // pred_check
      _
    $region27: #{tpu_custom_call.1} parent=1 // pred_check_branch
      %81 = sbr.rel (0) target = $region29
    $region28: #{tpu_custom_call.1} parent=1 // pred_region
      _
    $region29: #{tpu_custom_call.1} parent=1 // pred_fallthru
      _
    // Predicated region
    $region30: #{tpu_custom_call.1} parent=1 // pred_check
      _
    $region31: #{tpu_custom_call.1} parent=1 // pred_check_branch
      %83 = sbr.rel (0) target = $region33
    $region32: #{tpu_custom_call.1} parent=1 // pred_region
      %s85 = ssub.s32 2048, 2048
      %86 = vsyncadd [#allocation9], %s85
      %s87 = sshll.u32 [#allocation10], 4
      %s88 = int_to_ptr.vmem [resolvable:$true] %s87
      %93 = dma.hbm_to_vmem [thread:$0]  %s7, 2048, %s88, [#allocation9], 128, 128, 8
    $region33: #{tpu_custom_call.1} parent=1 // pred_fallthru
      _
    // Predicated region
    $region34: #{tpu_custom_call.1} parent=1 // pred_check
      _
    $region35: #{tpu_custom_call.1} parent=1 // pred_check_branch
      %95 = sbr.rel (0) target = $region37
    $region36: #{tpu_custom_call.1} parent=1 // pred_region
      _
    $region37: #{tpu_custom_call.1} parent=1 // pred_fallthru
      _
    // Predicated region
    $region38: #{tpu_custom_call.1} parent=1 // pred_check
      _
    $region39: #{tpu_custom_call.1} parent=1 // pred_check_branch
      %97 = sbr.rel (0) target = $region41
    $region40: #{tpu_custom_call.1} parent=1 // pred_region
      %s99 = ssub.s32 2048, 2048
      %100 = vsyncadd [#allocation12], %s99
      %s101 = sshll.u32 [#allocation11], 4
      %s102 = int_to_ptr.vmem [resolvable:$true] %s101
      %107 = dma.hbm_to_vmem [thread:$0]  %s9, 2048, %s102, [#allocation12], 128, 128, 8
    $region41: #{tpu_custom_call.1} parent=1 // pred_fallthru
      _
    // Predicated region
    $region42: #{tpu_custom_call.1} parent=1 // pred_check
      _
    $region43: #{tpu_custom_call.1} parent=1 // pred_check_branch
      %109 = sbr.rel (0) target = $region45
    $region44: #{tpu_custom_call.1} parent=1 // pred_region
      _
    $region45: #{tpu_custom_call.1} parent=1 // pred_fallthru
      _
    // Predicated region
    $region46: #{tpu_custom_call.1} parent=1 // pred_check
      _
    $region47: #{tpu_custom_call.1} parent=1 // pred_check_branch
      %111 = sbr.rel (0) target = $region49
    $region48: #{tpu_custom_call.1} parent=1 // pred_region
      %s113 = ssub.s32 2048, 2048
      %114 = vsyncadd [#allocation12], %s113
      %s115 = sshll.u32 [#allocation13], 4
      %s116 = int_to_ptr.vmem [resolvable:$true] %s115
      %121 = dma.hbm_to_vmem [thread:$0]  %s11, 2048, %s116, [#allocation12], 128, 128, 8
    $region49: #{tpu_custom_call.1} parent=1 // pred_fallthru
      _
    // Predicated region
    $region50: #{tpu_custom_call.1} parent=1 // pred_check
      _
    $region51: #{tpu_custom_call.1} parent=1 // pred_check_branch
      %123 = sbr.rel (0) target = $region53
    $region52: #{tpu_custom_call.1} parent=1 // pred_region
      _
    $region53: #{tpu_custom_call.1} parent=1 // pred_fallthru
      _
    // Predicated region
    $region54: #{tpu_custom_call.1} parent=1 // pred_check
      _
    $region55: #{tpu_custom_call.1} parent=1 // pred_check_branch
      %125 = sbr.rel (0) target = $region57
    $region56: #{tpu_custom_call.1} parent=1 // pred_region
      %s127 = ssub.s32 2048, 2048
      %128 = vsyncadd [#allocation15], %s127
      %s129 = sshll.u32 [#allocation14], 4
      %s130 = int_to_ptr.vmem [resolvable:$true] %s129
      %135 = dma.hbm_to_vmem [thread:$0]  %s13, 2048, %s130, [#allocation15], 128, 128, 8
    $region57: #{tpu_custom_call.1} parent=1 // pred_fallthru
      _
    // Predicated region
    $region58: #{tpu_custom_call.1} parent=1 // pred_check
      _
    $region59: #{tpu_custom_call.1} parent=1 // pred_check_branch
      %137 = sbr.rel (0) target = $region61
    $region60: #{tpu_custom_call.1} parent=1 // pred_region
      _
    $region61: #{tpu_custom_call.1} parent=1 // pred_fallthru
      _
    // Predicated region
    $region62: #{tpu_custom_call.1} parent=1 // pred_check
      _
    $region63: #{tpu_custom_call.1} parent=1 // pred_check_branch
      %139 = sbr.rel (0) target = $region65
    $region64: #{tpu_custom_call.1} parent=1 // pred_region
      %s141 = ssub.s32 2048, 2048
      %142 = vsyncadd [#allocation15], %s141
      %s143 = sshll.u32 [#allocation16], 4
      %s144 = int_to_ptr.vmem [resolvable:$true] %s143
      %149 = dma.hbm_to_vmem [thread:$0]  %s15, 2048, %s144, [#allocation15], 128, 128, 8
    $region65: #{tpu_custom_call.1} parent=1 // pred_fallthru
      _
    // Predicated region
    $region66: #{tpu_custom_call.1} parent=1 // pred_check
      _
    $region67: #{tpu_custom_call.1} parent=1 // pred_check_branch
      %151 = sbr.rel (0) target = $region69
    $region68: #{tpu_custom_call.1} parent=1 // pred_region
      _
    $region69: #{tpu_custom_call.1} parent=1 // pred_fallthru
      _
    // Predicated region
    $region70: #{tpu_custom_call.1} parent=1 // pred_check
      _
    $region71: #{tpu_custom_call.1} parent=1 // pred_check_branch
      %153 = sbr.rel (0) target = $region73
    $region72: #{tpu_custom_call.1} parent=1 // pred_region
      %154 = dma.done [#allocation3], 256
    $region73: #{tpu_custom_call.1} parent=1 // pred_fallthru
      _
    // Predicated region
    $region74: #{tpu_custom_call.1} parent=1 // pred_check
      _
    $region75: #{tpu_custom_call.1} parent=1 // pred_check_branch
      %156 = sbr.rel (0) target = $region77
    $region76: #{tpu_custom_call.1} parent=1 // pred_region
      %157 = dma.done [#allocation6], 2048
    $region77: #{tpu_custom_call.1} parent=1 // pred_fallthru
      _
    // Predicated region
    $region78: #{tpu_custom_call.1} parent=1 // pred_check
      _
    $region79: #{tpu_custom_call.1} parent=1 // pred_check_branch
      %159 = sbr.rel (0) target = $region81
    $region80: #{tpu_custom_call.1} parent=1 // pred_region
      %160 = dma.done [#allocation6], 2048
    $region81: #{tpu_custom_call.1} parent=1 // pred_fallthru
      _
    // Predicated region
    $region82: #{tpu_custom_call.1} parent=1 // pred_check
      _
    $region83: #{tpu_custom_call.1} parent=1 // pred_check_branch
      %162 = sbr.rel (0) target = $region85
    $region84: #{tpu_custom_call.1} parent=1 // pred_region
      %163 = dma.done [#allocation9], 2048
    $region85: #{tpu_custom_call.1} parent=1 // pred_fallthru
      _
    // Predicated region
    $region86: #{tpu_custom_call.1} parent=1 // pred_check
      _
    $region87: #{tpu_custom_call.1} parent=1 // pred_check_branch
      %165 = sbr.rel (0) target = $region89
    $region88: #{tpu_custom_call.1} parent=1 // pred_region
      %166 = dma.done [#allocation9], 2048
    $region89: #{tpu_custom_call.1} parent=1 // pred_fallthru
      _
    // Predicated region
    $region90: #{tpu_custom_call.1} parent=1 // pred_check
      _
    $region91: #{tpu_custom_call.1} parent=1 // pred_check_branch
      %168 = sbr.rel (0) target = $region93
    $region92: #{tpu_custom_call.1} parent=1 // pred_region
      %169 = dma.done [#allocation12], 2048
    $region93: #{tpu_custom_call.1} parent=1 // pred_fallthru
      _
    // Predicated region
    $region94: #{tpu_custom_call.1} parent=1 // pred_check
      _
    $region95: #{tpu_custom_call.1} parent=1 // pred_check_branch
      %171 = sbr.rel (0) target = $region97
    $region96: #{tpu_custom_call.1} parent=1 // pred_region
      %172 = dma.done [#allocation12], 2048
    $region97: #{tpu_custom_call.1} parent=1 // pred_fallthru
      _
    // Predicated region
    $region98: #{tpu_custom_call.1} parent=1 // pred_check
      _
    $region99: #{tpu_custom_call.1} parent=1 // pred_check_branch
      %174 = sbr.rel (0) target = $region101
    $region100: #{tpu_custom_call.1} parent=1 // pred_region
      %175 = dma.done [#allocation15], 2048
    $region101: #{tpu_custom_call.1} parent=1 // pred_fallthru
      _
    // Predicated region
    $region102: #{tpu_custom_call.1} parent=1 // pred_check
      _
    $region103: #{tpu_custom_call.1} parent=1 // pred_check_branch
      %177 = sbr.rel (0) target = $region105
    $region104: #{tpu_custom_call.1} parent=1 // pred_region
      %178 = dma.done [#allocation15], 2048
    $region105: #{tpu_custom_call.1} parent=1 // pred_fallthru
      _
    %v179 = vld [vmem:[#allocation2] sm:$0xff]
    %v180 = vld [vmem:[#allocation2 + $0x8] sm:$0xff]
    %v181 = vld [vmem:[#allocation5] sm:$0xff]
    %v182 = vld [vmem:[#allocation5 + $0x8] sm:$0xff]
    %v183 = vld [vmem:[#allocation5 + $0x10] sm:$0xff]
    %v184 = vld [vmem:[#allocation5 + $0x18] sm:$0xff]
    %v185 = vld [vmem:[#allocation5 + $0x20] sm:$0xff]
    %v186 = vld [vmem:[#allocation5 + $0x28] sm:$0xff]
    %v187 = vld [vmem:[#allocation5 + $0x30] sm:$0xff]
    %v188 = vld [vmem:[#allocation5 + $0x38] sm:$0xff]
    %v189 = vld [vmem:[#allocation5 + $0x40] sm:$0xff]
    %v190 = vld [vmem:[#allocation5 + $0x48] sm:$0xff]
    %v191 = vld [vmem:[#allocation5 + $0x50] sm:$0xff]
    %v192 = vld [vmem:[#allocation5 + $0x58] sm:$0xff]
    %v193 = vld [vmem:[#allocation5 + $0x60] sm:$0xff]
    %v194 = vld [vmem:[#allocation5 + $0x68] sm:$0xff]
    %v195 = vld [vmem:[#allocation5 + $0x70] sm:$0xff]
    %v196 = vld [vmem:[#allocation5 + $0x78] sm:$0xff]
    %v197 = vld [vmem:[%s2] sm:$0x1]
    %v199 = vlaneseq
    %v200 = vshrl.u32 %v199, 7
    %v201 = vsub.s32 0, %v200
    %v202 = vrot.slane %v197, %v201
    %204 = vmatprep.subr.mxu0 0.0
    %205 = vmatpush1.msra.mxu0 %v196
    %206 = vmatprep.subr.mxu0 0.0
    %207 = vmatpush1.msra.mxu0 %v195
    %208 = vmatprep.subr.mxu0 0.0
    %209 = vmatpush1.msra.mxu0 %v194
    %210 = vmatprep.subr.mxu0 0.0
    %211 = vmatpush1.msra.mxu0 %v193
    %212 = vmatprep.subr.mxu0 0.0
    %213 = vmatpush1.msra.mxu0 %v192
    %214 = vmatprep.subr.mxu0 0.0
    %215 = vmatpush1.msra.mxu0 %v191
    %216 = vmatprep.subr.mxu0 0.0
    %217 = vmatpush1.msra.mxu0 %v190
    %218 = vmatprep.subr.mxu0 0.0
    %219 = vmatpush1.msra.mxu0 %v189
    %220 = vmatprep.subr.mxu0 0.0
    %221 = vmatpush1.msra.mxu0 %v188
    %222 = vmatprep.subr.mxu0 0.0
    %223 = vmatpush1.msra.mxu0 %v187
    %224 = vmatprep.subr.mxu0 0.0
    %225 = vmatpush1.msra.mxu0 %v186
    %226 = vmatprep.subr.mxu0 0.0
    %227 = vmatpush1.msra.mxu0 %v185
    %228 = vmatprep.subr.mxu0 0.0
    %229 = vmatpush1.msra.mxu0 %v184
    %230 = vmatprep.subr.mxu0 0.0
    %231 = vmatpush1.msra.mxu0 %v183
    %232 = vmatprep.subr.mxu0 0.0
    %233 = vmatpush1.msra.mxu0 %v182
    %234 = vmatprep.subr.mxu0 0.0
    %235 = vmatpush1.msra.mxu0 %v181
    %236 = vmatprep.subr.mxu0 0.0
    %237 = vmatpush2.msra.mxu0 0.0
    %238 = vmatprep.subr.mxu0 0.0
    %239 = vmatpush2.msra.mxu0 0.0
    %240 = vmatprep.subr.mxu0 0.0
    %241 = vmatpush2.msra.mxu0 0.0
    %242 = vmatprep.subr.mxu0 0.0
    %243 = vmatpush2.msra.mxu0 0.0
    %244 = vmatprep.subr.mxu0 0.0
    %245 = vmatpush2.msra.mxu0 0.0
    %246 = vmatprep.subr.mxu0 0.0
    %247 = vmatpush2.msra.mxu0 0.0
    %248 = vmatprep.subr.mxu0 0.0
    %249 = vmatpush2.msra.mxu0 0.0
    %250 = vmatprep.subr.mxu0 0.0
    %251 = vmatpush2.msra.mxu0 0.0
    %252 = vmatprep.subr.mxu0 0.0
    %253 = vmatpush2.msra.mxu0 0.0
    %254 = vmatprep.subr.mxu0 0.0
    %255 = vmatpush2.msra.mxu0 0.0
    %256 = vmatprep.subr.mxu0 0.0
    %257 = vmatpush2.msra.mxu0 0.0
    %258 = vmatprep.subr.mxu0 0.0
    %259 = vmatpush2.msra.mxu0 0.0
    %260 = vmatprep.subr.mxu0 0.0
    %261 = vmatpush2.msra.mxu0 0.0
    %262 = vmatprep.subr.mxu0 0.0
    %263 = vmatpush2.msra.mxu0 0.0
    %264 = vmatprep.subr.mxu0 0.0
    %265 = vmatpush2.msra.mxu0 0.0
    %266 = vmatprep.subr.mxu0 0.0
    %267 = vmatpush2.msra.mxu0 0.0
    %268 = vmatprep.mubr.f32.mxu0 0.0
    %269 = vmatmul.mubr.f32.gmra.mxu0 %v179
    %v270 = vpop.f32.mrf.mxu0
    %v271 = vadd.f32 %v202, %v270
    %v272 = vpop.f32.mrf.mxu0
    %273 = vmatprep.mubr.f32.mxu0 0.0
    %274 = vmatmul.mubr.f32.gmra.mxu0 %v180
    %v275 = vpop.f32.mrf.mxu0
    %v276 = vadd.f32 %v202, %v275
    %v277 = vpop.f32.mrf.mxu0
    %278 = vdwg.mxu0
    %vm279 = vcmp.gt.f32.partialorder %v271, 0.0
    %vm280 = vcmp.gt.f32.partialorder %v276, 0.0
    %v281 = vmul.f32 %v271, 0.01
    %v282 = vmul.f32 %v276, 0.01
    %v283 = vsel %vm279, %v271, %v281
    %v284 = vsel %vm280, %v276, %v282
    %v285 = vld [vmem:[#allocation7] sm:$0xff]
    %v286 = vld [vmem:[#allocation7 + $0x8] sm:$0xff]
    %v287 = vld [vmem:[#allocation7 + $0x10] sm:$0xff]
    %v288 = vld [vmem:[#allocation7 + $0x18] sm:$0xff]
    %v289 = vld [vmem:[#allocation7 + $0x20] sm:$0xff]
    %v290 = vld [vmem:[#allocation7 + $0x28] sm:$0xff]
    %v291 = vld [vmem:[#allocation7 + $0x30] sm:$0xff]
    %v292 = vld [vmem:[#allocation7 + $0x38] sm:$0xff]
    %v293 = vld [vmem:[#allocation7 + $0x40] sm:$0xff]
    %v294 = vld [vmem:[#allocation7 + $0x48] sm:$0xff]
    %v295 = vld [vmem:[#allocation7 + $0x50] sm:$0xff]
    %v296 = vld [vmem:[#allocation7 + $0x58] sm:$0xff]
    %v297 = vld [vmem:[#allocation7 + $0x60] sm:$0xff]
    %v298 = vld [vmem:[#allocation7 + $0x68] sm:$0xff]
    %v299 = vld [vmem:[#allocation7 + $0x70] sm:$0xff]
    %v300 = vld [vmem:[#allocation7 + $0x78] sm:$0xff]
    %v301 = vld [vmem:[%s4] sm:$0x1]
    %v303 = vlaneseq
    %v304 = vshrl.u32 %v303, 7
    %v305 = vsub.s32 0, %v304
    %v306 = vrot.slane %v301, %v305
    %308 = vmatprep.subr.mxu0 0.0
    %309 = vmatpush1.msra.mxu0 %v300
    %310 = vmatprep.subr.mxu0 0.0
    %311 = vmatpush1.msra.mxu0 %v299
    %312 = vmatprep.subr.mxu0 0.0
    %313 = vmatpush1.msra.mxu0 %v298
    %314 = vmatprep.subr.mxu0 0.0
    %315 = vmatpush1.msra.mxu0 %v297
    %316 = vmatprep.subr.mxu0 0.0
    %317 = vmatpush1.msra.mxu0 %v296
    %318 = vmatprep.subr.mxu0 0.0
    %319 = vmatpush1.msra.mxu0 %v295
    %320 = vmatprep.subr.mxu0 0.0
    %321 = vmatpush1.msra.mxu0 %v294
    %322 = vmatprep.subr.mxu0 0.0
    %323 = vmatpush1.msra.mxu0 %v293
    %324 = vmatprep.subr.mxu0 0.0
    %325 = vmatpush1.msra.mxu0 %v292
    %326 = vmatprep.subr.mxu0 0.0
    %327 = vmatpush1.msra.mxu0 %v291
    %328 = vmatprep.subr.mxu0 0.0
    %329 = vmatpush1.msra.mxu0 %v290
    %330 = vmatprep.subr.mxu0 0.0
    %331 = vmatpush1.msra.mxu0 %v289
    %332 = vmatprep.subr.mxu0 0.0
    %333 = vmatpush1.msra.mxu0 %v288
    %334 = vmatprep.subr.mxu0 0.0
    %335 = vmatpush1.msra.mxu0 %v287
    %336 = vmatprep.subr.mxu0 0.0
    %337 = vmatpush1.msra.mxu0 %v286
    %338 = vmatprep.subr.mxu0 0.0
    %339 = vmatpush1.msra.mxu0 %v285
    %340 = vmatprep.subr.mxu0 0.0
    %341 = vmatpush2.msra.mxu0 0.0
    %342 = vmatprep.subr.mxu0 0.0
    %343 = vmatpush2.msra.mxu0 0.0
    %344 = vmatprep.subr.mxu0 0.0
    %345 = vmatpush2.msra.mxu0 0.0
    %346 = vmatprep.subr.mxu0 0.0
    %347 = vmatpush2.msra.mxu0 0.0
    %348 = vmatprep.subr.mxu0 0.0
    %349 = vmatpush2.msra.mxu0 0.0
    %350 = vmatprep.subr.mxu0 0.0
    %351 = vmatpush2.msra.mxu0 0.0
    %352 = vmatprep.subr.mxu0 0.0
    %353 = vmatpush2.msra.mxu0 0.0
    %354 = vmatprep.subr.mxu0 0.0
    %355 = vmatpush2.msra.mxu0 0.0
    %356 = vmatprep.subr.mxu0 0.0
    %357 = vmatpush2.msra.mxu0 0.0
    %358 = vmatprep.subr.mxu0 0.0
    %359 = vmatpush2.msra.mxu0 0.0
    %360 = vmatprep.subr.mxu0 0.0
    %361 = vmatpush2.msra.mxu0 0.0
    %362 = vmatprep.subr.mxu0 0.0
    %363 = vmatpush2.msra.mxu0 0.0
    %364 = vmatprep.subr.mxu0 0.0
    %365 = vmatpush2.msra.mxu0 0.0
    %366 = vmatprep.subr.mxu0 0.0
    %367 = vmatpush2.msra.mxu0 0.0
    %368 = vmatprep.subr.mxu0 0.0
    %369 = vmatpush2.msra.mxu0 0.0
    %370 = vmatprep.subr.mxu0 0.0
    %371 = vmatpush2.msra.mxu0 0.0
    %372 = vmatprep.mubr.f32.mxu0 0.0
    %373 = vmatmul.mubr.f32.gmra.mxu0 %v283
    %v374 = vpop.f32.mrf.mxu0
    %v375 = vadd.f32 %v306, %v374
    %v376 = vpop.f32.mrf.mxu0
    %377 = vmatprep.mubr.f32.mxu0 0.0
    %378 = vmatmul.mubr.f32.gmra.mxu0 %v284
    %v379 = vpop.f32.mrf.mxu0
    %v380 = vadd.f32 %v306, %v379
    %v381 = vpop.f32.mrf.mxu0
    %382 = vdwg.mxu0
    %vm383 = vcmp.gt.f32.partialorder %v375, 0.0
    %vm384 = vcmp.gt.f32.partialorder %v380, 0.0
    %v385 = vmul.f32 %v375, 0.01
    %v386 = vmul.f32 %v380, 0.01
    %v387 = vsel %vm383, %v375, %v385
    %v388 = vsel %vm384, %v380, %v386
    %v389 = vld [vmem:[#allocation8] sm:$0xff]
    %v390 = vld [vmem:[#allocation8 + $0x8] sm:$0xff]
    %v391 = vld [vmem:[#allocation8 + $0x10] sm:$0xff]
    %v392 = vld [vmem:[#allocation8 + $0x18] sm:$0xff]
    %v393 = vld [vmem:[#allocation8 + $0x20] sm:$0xff]
    %v394 = vld [vmem:[#allocation8 + $0x28] sm:$0xff]
    %v395 = vld [vmem:[#allocation8 + $0x30] sm:$0xff]
    %v396 = vld [vmem:[#allocation8 + $0x38] sm:$0xff]
    %v397 = vld [vmem:[#allocation8 + $0x40] sm:$0xff]
    %v398 = vld [vmem:[#allocation8 + $0x48] sm:$0xff]
    %v399 = vld [vmem:[#allocation8 + $0x50] sm:$0xff]
    %v400 = vld [vmem:[#allocation8 + $0x58] sm:$0xff]
    %v401 = vld [vmem:[#allocation8 + $0x60] sm:$0xff]
    %v402 = vld [vmem:[#allocation8 + $0x68] sm:$0xff]
    %v403 = vld [vmem:[#allocation8 + $0x70] sm:$0xff]
    %v404 = vld [vmem:[#allocation8 + $0x78] sm:$0xff]
    %v405 = vld [vmem:[%s6] sm:$0x1]
    %v407 = vlaneseq
    %v408 = vshrl.u32 %v407, 7
    %v409 = vsub.s32 0, %v408
    %v410 = vrot.slane %v405, %v409
    %412 = vmatprep.subr.mxu0 0.0
    %413 = vmatpush1.msra.mxu0 %v404
    %414 = vmatprep.subr.mxu0 0.0
    %415 = vmatpush1.msra.mxu0 %v403
    %416 = vmatprep.subr.mxu0 0.0
    %417 = vmatpush1.msra.mxu0 %v402
    %418 = vmatprep.subr.mxu0 0.0
    %419 = vmatpush1.msra.mxu0 %v401
    %420 = vmatprep.subr.mxu0 0.0
    %421 = vmatpush1.msra.mxu0 %v400
    %422 = vmatprep.subr.mxu0 0.0
    %423 = vmatpush1.msra.mxu0 %v399
    %424 = vmatprep.subr.mxu0 0.0
    %425 = vmatpush1.msra.mxu0 %v398
    %426 = vmatprep.subr.mxu0 0.0
    %427 = vmatpush1.msra.mxu0 %v397
    %428 = vmatprep.subr.mxu0 0.0
    %429 = vmatpush1.msra.mxu0 %v396
    %430 = vmatprep.subr.mxu0 0.0
    %431 = vmatpush1.msra.mxu0 %v395
    %432 = vmatprep.subr.mxu0 0.0
    %433 = vmatpush1.msra.mxu0 %v394
    %434 = vmatprep.subr.mxu0 0.0
    %435 = vmatpush1.msra.mxu0 %v393
    %436 = vmatprep.subr.mxu0 0.0
    %437 = vmatpush1.msra.mxu0 %v392
    %438 = vmatprep.subr.mxu0 0.0
    %439 = vmatpush1.msra.mxu0 %v391
    %440 = vmatprep.subr.mxu0 0.0
    %441 = vmatpush1.msra.mxu0 %v390
    %442 = vmatprep.subr.mxu0 0.0
    %443 = vmatpush1.msra.mxu0 %v389
    %444 = vmatprep.subr.mxu0 0.0
    %445 = vmatpush2.msra.mxu0 0.0
    %446 = vmatprep.subr.mxu0 0.0
    %447 = vmatpush2.msra.mxu0 0.0
    %448 = vmatprep.subr.mxu0 0.0
    %449 = vmatpush2.msra.mxu0 0.0
    %450 = vmatprep.subr.mxu0 0.0
    %451 = vmatpush2.msra.mxu0 0.0
    %452 = vmatprep.subr.mxu0 0.0
    %453 = vmatpush2.msra.mxu0 0.0
    %454 = vmatprep.subr.mxu0 0.0
    %455 = vmatpush2.msra.mxu0 0.0
    %456 = vmatprep.subr.mxu0 0.0
    %457 = vmatpush2.msra.mxu0 0.0
    %458 = vmatprep.subr.mxu0 0.0
    %459 = vmatpush2.msra.mxu0 0.0
    %460 = vmatprep.subr.mxu0 0.0
    %461 = vmatpush2.msra.mxu0 0.0
    %462 = vmatprep.subr.mxu0 0.0
    %463 = vmatpush2.msra.mxu0 0.0
    %464 = vmatprep.subr.mxu0 0.0
    %465 = vmatpush2.msra.mxu0 0.0
    %466 = vmatprep.subr.mxu0 0.0
    %467 = vmatpush2.msra.mxu0 0.0
    %468 = vmatprep.subr.mxu0 0.0
    %469 = vmatpush2.msra.mxu0 0.0
    %470 = vmatprep.subr.mxu0 0.0
    %471 = vmatpush2.msra.mxu0 0.0
    %472 = vmatprep.subr.mxu0 0.0
    %473 = vmatpush2.msra.mxu0 0.0
    %474 = vmatprep.subr.mxu0 0.0
    %475 = vmatpush2.msra.mxu0 0.0
    %476 = vmatprep.mubr.f32.mxu0 0.0
    %477 = vmatmul.mubr.f32.gmra.mxu0 %v387
    %v478 = vpop.f32.mrf.mxu0
    %v479 = vadd.f32 %v410, %v478
    %v480 = vpop.f32.mrf.mxu0
    %481 = vmatprep.mubr.f32.mxu0 0.0
    %482 = vmatmul.mubr.f32.gmra.mxu0 %v388
    %v483 = vpop.f32.mrf.mxu0
    %v484 = vadd.f32 %v410, %v483
    %v485 = vpop.f32.mrf.mxu0
    %486 = vdwg.mxu0
    %vm487 = vcmp.gt.f32.partialorder %v479, 0.0
    %vm488 = vcmp.gt.f32.partialorder %v484, 0.0
    %v489 = vmul.f32 %v479, 0.01
    %v490 = vmul.f32 %v484, 0.01
    %v491 = vsel %vm487, %v479, %v489
    %v492 = vsel %vm488, %v484, %v490
    %v493 = vld [vmem:[#allocation10] sm:$0xff]
    %v494 = vld [vmem:[#allocation10 + $0x8] sm:$0xff]
    %v495 = vld [vmem:[#allocation10 + $0x10] sm:$0xff]
    %v496 = vld [vmem:[#allocation10 + $0x18] sm:$0xff]
    %v497 = vld [vmem:[#allocation10 + $0x20] sm:$0xff]
    %v498 = vld [vmem:[#allocation10 + $0x28] sm:$0xff]
    %v499 = vld [vmem:[#allocation10 + $0x30] sm:$0xff]
    %v500 = vld [vmem:[#allocation10 + $0x38] sm:$0xff]
    %v501 = vld [vmem:[#allocation10 + $0x40] sm:$0xff]
    %v502 = vld [vmem:[#allocation10 + $0x48] sm:$0xff]
    %v503 = vld [vmem:[#allocation10 + $0x50] sm:$0xff]
    %v504 = vld [vmem:[#allocation10 + $0x58] sm:$0xff]
    %v505 = vld [vmem:[#allocation10 + $0x60] sm:$0xff]
    %v506 = vld [vmem:[#allocation10 + $0x68] sm:$0xff]
    %v507 = vld [vmem:[#allocation10 + $0x70] sm:$0xff]
    %v508 = vld [vmem:[#allocation10 + $0x78] sm:$0xff]
    %v509 = vld [vmem:[%s8] sm:$0x1]
    %v511 = vlaneseq
    %v512 = vshrl.u32 %v511, 7
    %v513 = vsub.s32 0, %v512
    %v514 = vrot.slane %v509, %v513
    %516 = vmatprep.subr.mxu0 0.0
    %517 = vmatpush1.msra.mxu0 %v508
    %518 = vmatprep.subr.mxu0 0.0
    %519 = vmatpush1.msra.mxu0 %v507
    %520 = vmatprep.subr.mxu0 0.0
    %521 = vmatpush1.msra.mxu0 %v506
    %522 = vmatprep.subr.mxu0 0.0
    %523 = vmatpush1.msra.mxu0 %v505
    %524 = vmatprep.subr.mxu0 0.0
    %525 = vmatpush1.msra.mxu0 %v504
    %526 = vmatprep.subr.mxu0 0.0
    %527 = vmatpush1.msra.mxu0 %v503
    %528 = vmatprep.subr.mxu0 0.0
    %529 = vmatpush1.msra.mxu0 %v502
    %530 = vmatprep.subr.mxu0 0.0
    %531 = vmatpush1.msra.mxu0 %v501
    %532 = vmatprep.subr.mxu0 0.0
    %533 = vmatpush1.msra.mxu0 %v500
    %534 = vmatprep.subr.mxu0 0.0
    %535 = vmatpush1.msra.mxu0 %v499
    %536 = vmatprep.subr.mxu0 0.0
    %537 = vmatpush1.msra.mxu0 %v498
    %538 = vmatprep.subr.mxu0 0.0
    %539 = vmatpush1.msra.mxu0 %v497
    %540 = vmatprep.subr.mxu0 0.0
    %541 = vmatpush1.msra.mxu0 %v496
    %542 = vmatprep.subr.mxu0 0.0
    %543 = vmatpush1.msra.mxu0 %v495
    %544 = vmatprep.subr.mxu0 0.0
    %545 = vmatpush1.msra.mxu0 %v494
    %546 = vmatprep.subr.mxu0 0.0
    %547 = vmatpush1.msra.mxu0 %v493
    %548 = vmatprep.subr.mxu0 0.0
    %549 = vmatpush2.msra.mxu0 0.0
    %550 = vmatprep.subr.mxu0 0.0
    %551 = vmatpush2.msra.mxu0 0.0
    %552 = vmatprep.subr.mxu0 0.0
    %553 = vmatpush2.msra.mxu0 0.0
    %554 = vmatprep.subr.mxu0 0.0
    %555 = vmatpush2.msra.mxu0 0.0
    %556 = vmatprep.subr.mxu0 0.0
    %557 = vmatpush2.msra.mxu0 0.0
    %558 = vmatprep.subr.mxu0 0.0
    %559 = vmatpush2.msra.mxu0 0.0
    %560 = vmatprep.subr.mxu0 0.0
    %561 = vmatpush2.msra.mxu0 0.0
    %562 = vmatprep.subr.mxu0 0.0
    %563 = vmatpush2.msra.mxu0 0.0
    %564 = vmatprep.subr.mxu0 0.0
    %565 = vmatpush2.msra.mxu0 0.0
    %566 = vmatprep.subr.mxu0 0.0
    %567 = vmatpush2.msra.mxu0 0.0
    %568 = vmatprep.subr.mxu0 0.0
    %569 = vmatpush2.msra.mxu0 0.0
    %570 = vmatprep.subr.mxu0 0.0
    %571 = vmatpush2.msra.mxu0 0.0
    %572 = vmatprep.subr.mxu0 0.0
    %573 = vmatpush2.msra.mxu0 0.0
    %574 = vmatprep.subr.mxu0 0.0
    %575 = vmatpush2.msra.mxu0 0.0
    %576 = vmatprep.subr.mxu0 0.0
    %577 = vmatpush2.msra.mxu0 0.0
    %578 = vmatprep.subr.mxu0 0.0
    %579 = vmatpush2.msra.mxu0 0.0
    %580 = vmatprep.mubr.f32.mxu0 0.0
    %581 = vmatmul.mubr.f32.gmra.mxu0 %v491
    %v582 = vpop.f32.mrf.mxu0
    %v583 = vadd.f32 %v514, %v582
    %v584 = vpop.f32.mrf.mxu0
    %585 = vmatprep.mubr.f32.mxu0 0.0
    %586 = vmatmul.mubr.f32.gmra.mxu0 %v492
    %v587 = vpop.f32.mrf.mxu0
    %v588 = vadd.f32 %v514, %v587
    %v589 = vpop.f32.mrf.mxu0
    %590 = vdwg.mxu0
    %v591 = vld [vmem:[#allocation11] sm:$0xff]
    %v592 = vld [vmem:[#allocation11 + $0x8] sm:$0xff]
    %v593 = vld [vmem:[#allocation11 + $0x10] sm:$0xff]
    %v594 = vld [vmem:[#allocation11 + $0x18] sm:$0xff]
    %v595 = vld [vmem:[#allocation11 + $0x20] sm:$0xff]
    %v596 = vld [vmem:[#allocation11 + $0x28] sm:$0xff]
    %v597 = vld [vmem:[#allocation11 + $0x30] sm:$0xff]
    %v598 = vld [vmem:[#allocation11 + $0x38] sm:$0xff]
    %v599 = vld [vmem:[#allocation11 + $0x40] sm:$0xff]
    %v600 = vld [vmem:[#allocation11 + $0x48] sm:$0xff]
    %v601 = vld [vmem:[#allocation11 + $0x50] sm:$0xff]
    %v602 = vld [vmem:[#allocation11 + $0x58] sm:$0xff]
    %v603 = vld [vmem:[#allocation11 + $0x60] sm:$0xff]
    %v604 = vld [vmem:[#allocation11 + $0x68] sm:$0xff]
    %v605 = vld [vmem:[#allocation11 + $0x70] sm:$0xff]
    %v606 = vld [vmem:[#allocation11 + $0x78] sm:$0xff]
    %v607 = vld [vmem:[%s10] sm:$0x1]
    %v609 = vlaneseq
    %v610 = vshrl.u32 %v609, 7
    %v611 = vsub.s32 0, %v610
    %v612 = vrot.slane %v607, %v611
    %614 = vmatprep.subr.mxu0 0.0
    %615 = vmatpush1.msra.mxu0 %v606
    %616 = vmatprep.subr.mxu0 0.0
    %617 = vmatpush1.msra.mxu0 %v605
    %618 = vmatprep.subr.mxu0 0.0
    %619 = vmatpush1.msra.mxu0 %v604
    %620 = vmatprep.subr.mxu0 0.0
    %621 = vmatpush1.msra.mxu0 %v603
    %622 = vmatprep.subr.mxu0 0.0
    %623 = vmatpush1.msra.mxu0 %v602
    %624 = vmatprep.subr.mxu0 0.0
    %625 = vmatpush1.msra.mxu0 %v601
    %626 = vmatprep.subr.mxu0 0.0
    %627 = vmatpush1.msra.mxu0 %v600
    %628 = vmatprep.subr.mxu0 0.0
    %629 = vmatpush1.msra.mxu0 %v599
    %630 = vmatprep.subr.mxu0 0.0
    %631 = vmatpush1.msra.mxu0 %v598
    %632 = vmatprep.subr.mxu0 0.0
    %633 = vmatpush1.msra.mxu0 %v597
    %634 = vmatprep.subr.mxu0 0.0
    %635 = vmatpush1.msra.mxu0 %v596
    %636 = vmatprep.subr.mxu0 0.0
    %637 = vmatpush1.msra.mxu0 %v595
    %638 = vmatprep.subr.mxu0 0.0
    %639 = vmatpush1.msra.mxu0 %v594
    %640 = vmatprep.subr.mxu0 0.0
    %641 = vmatpush1.msra.mxu0 %v593
    %642 = vmatprep.subr.mxu0 0.0
    %643 = vmatpush1.msra.mxu0 %v592
    %644 = vmatprep.subr.mxu0 0.0
    %645 = vmatpush1.msra.mxu0 %v591
    %646 = vmatprep.subr.mxu0 0.0
    %647 = vmatpush2.msra.mxu0 0.0
    %648 = vmatprep.subr.mxu0 0.0
    %649 = vmatpush2.msra.mxu0 0.0
    %650 = vmatprep.subr.mxu0 0.0
    %651 = vmatpush2.msra.mxu0 0.0
    %652 = vmatprep.subr.mxu0 0.0
    %653 = vmatpush2.msra.mxu0 0.0
    %654 = vmatprep.subr.mxu0 0.0
    %655 = vmatpush2.msra.mxu0 0.0
    %656 = vmatprep.subr.mxu0 0.0
    %657 = vmatpush2.msra.mxu0 0.0
    %658 = vmatprep.subr.mxu0 0.0
    %659 = vmatpush2.msra.mxu0 0.0
    %660 = vmatprep.subr.mxu0 0.0
    %661 = vmatpush2.msra.mxu0 0.0
    %662 = vmatprep.subr.mxu0 0.0
    %663 = vmatpush2.msra.mxu0 0.0
    %664 = vmatprep.subr.mxu0 0.0
    %665 = vmatpush2.msra.mxu0 0.0
    %666 = vmatprep.subr.mxu0 0.0
    %667 = vmatpush2.msra.mxu0 0.0
    %668 = vmatprep.subr.mxu0 0.0
    %669 = vmatpush2.msra.mxu0 0.0
    %670 = vmatprep.subr.mxu0 0.0
    %671 = vmatpush2.msra.mxu0 0.0
    %672 = vmatprep.subr.mxu0 0.0
    %673 = vmatpush2.msra.mxu0 0.0
    %674 = vmatprep.subr.mxu0 0.0
    %675 = vmatpush2.msra.mxu0 0.0
    %676 = vmatprep.subr.mxu0 0.0
    %677 = vmatpush2.msra.mxu0 0.0
    %678 = vmatprep.mubr.f32.mxu0 0.0
    %679 = vmatmul.mubr.f32.gmra.mxu0 %v583
    %v680 = vpop.f32.mrf.mxu0
    %v681 = vadd.f32 %v612, %v680
    %v682 = vpop.f32.mrf.mxu0
    %683 = vmatprep.mubr.f32.mxu0 0.0
    %684 = vmatmul.mubr.f32.gmra.mxu0 %v588
    %v685 = vpop.f32.mrf.mxu0
    %v686 = vadd.f32 %v612, %v685
    %v687 = vpop.f32.mrf.mxu0
    %688 = vdwg.mxu0
    %vm689 = vcmp.gt.f32.partialorder %v681, 0.0
    %vm690 = vcmp.gt.f32.partialorder %v686, 0.0
    %v691 = vmul.f32 %v681, 0.01
    %v692 = vmul.f32 %v686, 0.01
    %v693 = vsel %vm689, %v681, %v691
    %v694 = vsel %vm690, %v686, %v692
    %v695 = vld [vmem:[#allocation13] sm:$0xff]
    %v696 = vld [vmem:[#allocation13 + $0x8] sm:$0xff]
    %v697 = vld [vmem:[#allocation13 + $0x10] sm:$0xff]
    %v698 = vld [vmem:[#allocation13 + $0x18] sm:$0xff]
    %v699 = vld [vmem:[#allocation13 + $0x20] sm:$0xff]
    %v700 = vld [vmem:[#allocation13 + $0x28] sm:$0xff]
    %v701 = vld [vmem:[#allocation13 + $0x30] sm:$0xff]
    %v702 = vld [vmem:[#allocation13 + $0x38] sm:$0xff]
    %v703 = vld [vmem:[#allocation13 + $0x40] sm:$0xff]
    %v704 = vld [vmem:[#allocation13 + $0x48] sm:$0xff]
    %v705 = vld [vmem:[#allocation13 + $0x50] sm:$0xff]
    %v706 = vld [vmem:[#allocation13 + $0x58] sm:$0xff]
    %v707 = vld [vmem:[#allocation13 + $0x60] sm:$0xff]
    %v708 = vld [vmem:[#allocation13 + $0x68] sm:$0xff]
    %v709 = vld [vmem:[#allocation13 + $0x70] sm:$0xff]
    %v710 = vld [vmem:[#allocation13 + $0x78] sm:$0xff]
    %v711 = vld [vmem:[%s12] sm:$0x1]
    %v713 = vlaneseq
    %v714 = vshrl.u32 %v713, 7
    %v715 = vsub.s32 0, %v714
    %v716 = vrot.slane %v711, %v715
    %718 = vmatprep.subr.mxu0 0.0
    %719 = vmatpush1.msra.mxu0 %v710
    %720 = vmatprep.subr.mxu0 0.0
    %721 = vmatpush1.msra.mxu0 %v709
    %722 = vmatprep.subr.mxu0 0.0
    %723 = vmatpush1.msra.mxu0 %v708
    %724 = vmatprep.subr.mxu0 0.0
    %725 = vmatpush1.msra.mxu0 %v707
    %726 = vmatprep.subr.mxu0 0.0
    %727 = vmatpush1.msra.mxu0 %v706
    %728 = vmatprep.subr.mxu0 0.0
    %729 = vmatpush1.msra.mxu0 %v705
    %730 = vmatprep.subr.mxu0 0.0
    %731 = vmatpush1.msra.mxu0 %v704
    %732 = vmatprep.subr.mxu0 0.0
    %733 = vmatpush1.msra.mxu0 %v703
    %734 = vmatprep.subr.mxu0 0.0
    %735 = vmatpush1.msra.mxu0 %v702
    %736 = vmatprep.subr.mxu0 0.0
    %737 = vmatpush1.msra.mxu0 %v701
    %738 = vmatprep.subr.mxu0 0.0
    %739 = vmatpush1.msra.mxu0 %v700
    %740 = vmatprep.subr.mxu0 0.0
    %741 = vmatpush1.msra.mxu0 %v699
    %742 = vmatprep.subr.mxu0 0.0
    %743 = vmatpush1.msra.mxu0 %v698
    %744 = vmatprep.subr.mxu0 0.0
    %745 = vmatpush1.msra.mxu0 %v697
    %746 = vmatprep.subr.mxu0 0.0
    %747 = vmatpush1.msra.mxu0 %v696
    %748 = vmatprep.subr.mxu0 0.0
    %749 = vmatpush1.msra.mxu0 %v695
    %750 = vmatprep.subr.mxu0 0.0
    %751 = vmatpush2.msra.mxu0 0.0
    %752 = vmatprep.subr.mxu0 0.0
    %753 = vmatpush2.msra.mxu0 0.0
    %754 = vmatprep.subr.mxu0 0.0
    %755 = vmatpush2.msra.mxu0 0.0
    %756 = vmatprep.subr.mxu0 0.0
    %757 = vmatpush2.msra.mxu0 0.0
    %758 = vmatprep.subr.mxu0 0.0
    %759 = vmatpush2.msra.mxu0 0.0
    %760 = vmatprep.subr.mxu0 0.0
    %761 = vmatpush2.msra.mxu0 0.0
    %762 = vmatprep.subr.mxu0 0.0
    %763 = vmatpush2.msra.mxu0 0.0
    %764 = vmatprep.subr.mxu0 0.0
    %765 = vmatpush2.msra.mxu0 0.0
    %766 = vmatprep.subr.mxu0 0.0
    %767 = vmatpush2.msra.mxu0 0.0
    %768 = vmatprep.subr.mxu0 0.0
    %769 = vmatpush2.msra.mxu0 0.0
    %770 = vmatprep.subr.mxu0 0.0
    %771 = vmatpush2.msra.mxu0 0.0
    %772 = vmatprep.subr.mxu0 0.0
    %773 = vmatpush2.msra.mxu0 0.0
    %774 = vmatprep.subr.mxu0 0.0
    %775 = vmatpush2.msra.mxu0 0.0
    %776 = vmatprep.subr.mxu0 0.0
    %777 = vmatpush2.msra.mxu0 0.0
    %778 = vmatprep.subr.mxu0 0.0
    %779 = vmatpush2.msra.mxu0 0.0
    %780 = vmatprep.subr.mxu0 0.0
    %781 = vmatpush2.msra.mxu0 0.0
    %782 = vmatprep.mubr.f32.mxu0 0.0
    %783 = vmatmul.mubr.f32.gmra.mxu0 %v693
    %v784 = vpop.f32.mrf.mxu0
    %v785 = vadd.f32 %v716, %v784
    %v786 = vpop.f32.mrf.mxu0
    %787 = vmatprep.mubr.f32.mxu0 0.0
    %788 = vmatmul.mubr.f32.gmra.mxu0 %v694
    %v789 = vpop.f32.mrf.mxu0
    %v790 = vadd.f32 %v716, %v789
    %v791 = vpop.f32.mrf.mxu0
    %792 = vdwg.mxu0
    %vm793 = vcmp.gt.f32.partialorder %v785, 0.0
    %vm794 = vcmp.gt.f32.partialorder %v790, 0.0
    %v795 = vmul.f32 %v785, 0.01
    %v796 = vmul.f32 %v790, 0.01
    %v797 = vsel %vm793, %v785, %v795
    %v798 = vsel %vm794, %v790, %v796
    %v799 = vld [vmem:[#allocation14] sm:$0xff]
    %v800 = vld [vmem:[#allocation14 + $0x8] sm:$0xff]
    %v801 = vld [vmem:[#allocation14 + $0x10] sm:$0xff]
    %v802 = vld [vmem:[#allocation14 + $0x18] sm:$0xff]
    %v803 = vld [vmem:[#allocation14 + $0x20] sm:$0xff]
    %v804 = vld [vmem:[#allocation14 + $0x28] sm:$0xff]
    %v805 = vld [vmem:[#allocation14 + $0x30] sm:$0xff]
    %v806 = vld [vmem:[#allocation14 + $0x38] sm:$0xff]
    %v807 = vld [vmem:[#allocation14 + $0x40] sm:$0xff]
    %v808 = vld [vmem:[#allocation14 + $0x48] sm:$0xff]
    %v809 = vld [vmem:[#allocation14 + $0x50] sm:$0xff]
    %v810 = vld [vmem:[#allocation14 + $0x58] sm:$0xff]
    %v811 = vld [vmem:[#allocation14 + $0x60] sm:$0xff]
    %v812 = vld [vmem:[#allocation14 + $0x68] sm:$0xff]
    %v813 = vld [vmem:[#allocation14 + $0x70] sm:$0xff]
    %v814 = vld [vmem:[#allocation14 + $0x78] sm:$0xff]
    %v815 = vld [vmem:[%s14] sm:$0x1]
    %v817 = vlaneseq
    %v818 = vshrl.u32 %v817, 7
    %v819 = vsub.s32 0, %v818
    %v820 = vrot.slane %v815, %v819
    %822 = vmatprep.subr.mxu0 0.0
    %823 = vmatpush1.msra.mxu0 %v814
    %824 = vmatprep.subr.mxu0 0.0
    %825 = vmatpush1.msra.mxu0 %v813
    %826 = vmatprep.subr.mxu0 0.0
    %827 = vmatpush1.msra.mxu0 %v812
    %828 = vmatprep.subr.mxu0 0.0
    %829 = vmatpush1.msra.mxu0 %v811
    %830 = vmatprep.subr.mxu0 0.0
    %831 = vmatpush1.msra.mxu0 %v810
    %832 = vmatprep.subr.mxu0 0.0
    %833 = vmatpush1.msra.mxu0 %v809
    %834 = vmatprep.subr.mxu0 0.0
    %835 = vmatpush1.msra.mxu0 %v808
    %836 = vmatprep.subr.mxu0 0.0
    %837 = vmatpush1.msra.mxu0 %v807
    %838 = vmatprep.subr.mxu0 0.0
    %839 = vmatpush1.msra.mxu0 %v806
    %840 = vmatprep.subr.mxu0 0.0
    %841 = vmatpush1.msra.mxu0 %v805
    %842 = vmatprep.subr.mxu0 0.0
    %843 = vmatpush1.msra.mxu0 %v804
    %844 = vmatprep.subr.mxu0 0.0
    %845 = vmatpush1.msra.mxu0 %v803
    %846 = vmatprep.subr.mxu0 0.0
    %847 = vmatpush1.msra.mxu0 %v802
    %848 = vmatprep.subr.mxu0 0.0
    %849 = vmatpush1.msra.mxu0 %v801
    %850 = vmatprep.subr.mxu0 0.0
    %851 = vmatpush1.msra.mxu0 %v800
    %852 = vmatprep.subr.mxu0 0.0
    %853 = vmatpush1.msra.mxu0 %v799
    %854 = vmatprep.subr.mxu0 0.0
    %855 = vmatpush2.msra.mxu0 0.0
    %856 = vmatprep.subr.mxu0 0.0
    %857 = vmatpush2.msra.mxu0 0.0
    %858 = vmatprep.subr.mxu0 0.0
    %859 = vmatpush2.msra.mxu0 0.0
    %860 = vmatprep.subr.mxu0 0.0
    %861 = vmatpush2.msra.mxu0 0.0
    %862 = vmatprep.subr.mxu0 0.0
    %863 = vmatpush2.msra.mxu0 0.0
    %864 = vmatprep.subr.mxu0 0.0
    %865 = vmatpush2.msra.mxu0 0.0
    %866 = vmatprep.subr.mxu0 0.0
    %867 = vmatpush2.msra.mxu0 0.0
    %868 = vmatprep.subr.mxu0 0.0
    %869 = vmatpush2.msra.mxu0 0.0
    %870 = vmatprep.subr.mxu0 0.0
    %871 = vmatpush2.msra.mxu0 0.0
    %872 = vmatprep.subr.mxu0 0.0
    %873 = vmatpush2.msra.mxu0 0.0
    %874 = vmatprep.subr.mxu0 0.0
    %875 = vmatpush2.msra.mxu0 0.0
    %876 = vmatprep.subr.mxu0 0.0
    %877 = vmatpush2.msra.mxu0 0.0
    %878 = vmatprep.subr.mxu0 0.0
    %879 = vmatpush2.msra.mxu0 0.0
    %880 = vmatprep.subr.mxu0 0.0
    %881 = vmatpush2.msra.mxu0 0.0
    %882 = vmatprep.subr.mxu0 0.0
    %883 = vmatpush2.msra.mxu0 0.0
    %884 = vmatprep.subr.mxu0 0.0
    %885 = vmatpush2.msra.mxu0 0.0
    %886 = vmatprep.mubr.f32.mxu0 0.0
    %887 = vmatmul.mubr.f32.gmra.mxu0 %v797
    %v888 = vpop.f32.mrf.mxu0
    %v889 = vadd.f32 %v820, %v888
    %v890 = vpop.f32.mrf.mxu0
    %891 = vmatprep.mubr.f32.mxu0 0.0
    %892 = vmatmul.mubr.f32.gmra.mxu0 %v798
    %v893 = vpop.f32.mrf.mxu0
    %v894 = vadd.f32 %v820, %v893
    %v895 = vpop.f32.mrf.mxu0
    %896 = vdwg.mxu0
    %vm897 = vcmp.gt.f32.partialorder %v889, 0.0
    %vm898 = vcmp.gt.f32.partialorder %v894, 0.0
    %v899 = vmul.f32 %v889, 0.01
    %v900 = vmul.f32 %v894, 0.01
    %v901 = vsel %vm897, %v889, %v899
    %v902 = vsel %vm898, %v894, %v900
    %v903 = vld [vmem:[#allocation16] sm:$0xff]
    %v904 = vld [vmem:[#allocation16 + $0x8] sm:$0xff]
    %v905 = vld [vmem:[#allocation16 + $0x10] sm:$0xff]
    %v906 = vld [vmem:[#allocation16 + $0x18] sm:$0xff]
    %v907 = vld [vmem:[#allocation16 + $0x20] sm:$0xff]
    %v908 = vld [vmem:[#allocation16 + $0x28] sm:$0xff]
    %v909 = vld [vmem:[#allocation16 + $0x30] sm:$0xff]
    %v910 = vld [vmem:[#allocation16 + $0x38] sm:$0xff]
    %v911 = vld [vmem:[#allocation16 + $0x40] sm:$0xff]
    %v912 = vld [vmem:[#allocation16 + $0x48] sm:$0xff]
    %v913 = vld [vmem:[#allocation16 + $0x50] sm:$0xff]
    %v914 = vld [vmem:[#allocation16 + $0x58] sm:$0xff]
    %v915 = vld [vmem:[#allocation16 + $0x60] sm:$0xff]
    %v916 = vld [vmem:[#allocation16 + $0x68] sm:$0xff]
    %v917 = vld [vmem:[#allocation16 + $0x70] sm:$0xff]
    %v918 = vld [vmem:[#allocation16 + $0x78] sm:$0xff]
    %v919 = vld [vmem:[%s16] sm:$0x1]
    %v921 = vlaneseq
    %v922 = vshrl.u32 %v921, 7
    %v923 = vsub.s32 0, %v922
    %v924 = vrot.slane %v919, %v923
    %926 = vmatprep.subr.mxu0 0.0
    %927 = vmatpush1.msra.mxu0 %v918
    %928 = vmatprep.subr.mxu0 0.0
    %929 = vmatpush1.msra.mxu0 %v917
    %930 = vmatprep.subr.mxu0 0.0
    %931 = vmatpush1.msra.mxu0 %v916
    %932 = vmatprep.subr.mxu0 0.0
    %933 = vmatpush1.msra.mxu0 %v915
    %934 = vmatprep.subr.mxu0 0.0
    %935 = vmatpush1.msra.mxu0 %v914
    %936 = vmatprep.subr.mxu0 0.0
    %937 = vmatpush1.msra.mxu0 %v913
    %938 = vmatprep.subr.mxu0 0.0
    %939 = vmatpush1.msra.mxu0 %v912
    %940 = vmatprep.subr.mxu0 0.0
    %941 = vmatpush1.msra.mxu0 %v911
    %942 = vmatprep.subr.mxu0 0.0
    %943 = vmatpush1.msra.mxu0 %v910
    %944 = vmatprep.subr.mxu0 0.0
    %945 = vmatpush1.msra.mxu0 %v909
    %946 = vmatprep.subr.mxu0 0.0
    %947 = vmatpush1.msra.mxu0 %v908
    %948 = vmatprep.subr.mxu0 0.0
    %949 = vmatpush1.msra.mxu0 %v907
    %950 = vmatprep.subr.mxu0 0.0
    %951 = vmatpush1.msra.mxu0 %v906
    %952 = vmatprep.subr.mxu0 0.0
    %953 = vmatpush1.msra.mxu0 %v905
    %954 = vmatprep.subr.mxu0 0.0
    %955 = vmatpush1.msra.mxu0 %v904
    %956 = vmatprep.subr.mxu0 0.0
    %957 = vmatpush1.msra.mxu0 %v903
    %958 = vmatprep.subr.mxu0 0.0
    %959 = vmatpush2.msra.mxu0 0.0
    %960 = vmatprep.subr.mxu0 0.0
    %961 = vmatpush2.msra.mxu0 0.0
    %962 = vmatprep.subr.mxu0 0.0
    %963 = vmatpush2.msra.mxu0 0.0
    %964 = vmatprep.subr.mxu0 0.0
    %965 = vmatpush2.msra.mxu0 0.0
    %966 = vmatprep.subr.mxu0 0.0
    %967 = vmatpush2.msra.mxu0 0.0
    %968 = vmatprep.subr.mxu0 0.0
    %969 = vmatpush2.msra.mxu0 0.0
    %970 = vmatprep.subr.mxu0 0.0
    %971 = vmatpush2.msra.mxu0 0.0
    %972 = vmatprep.subr.mxu0 0.0
    %973 = vmatpush2.msra.mxu0 0.0
    %974 = vmatprep.subr.mxu0 0.0
    %975 = vmatpush2.msra.mxu0 0.0
    %976 = vmatprep.subr.mxu0 0.0
    %977 = vmatpush2.msra.mxu0 0.0
    %978 = vmatprep.subr.mxu0 0.0
    %979 = vmatpush2.msra.mxu0 0.0
    %980 = vmatprep.subr.mxu0 0.0
    %981 = vmatpush2.msra.mxu0 0.0
    %982 = vmatprep.subr.mxu0 0.0
    %983 = vmatpush2.msra.mxu0 0.0
    %984 = vmatprep.subr.mxu0 0.0
    %985 = vmatpush2.msra.mxu0 0.0
    %986 = vmatprep.subr.mxu0 0.0
    %987 = vmatpush2.msra.mxu0 0.0
    %988 = vmatprep.subr.mxu0 0.0
    %989 = vmatpush2.msra.mxu0 0.0
    %990 = vmatprep.mubr.f32.mxu0 0.0
    %991 = vmatmul.mubr.f32.gmra.mxu0 %v901
    %v992 = vpop.f32.mrf.mxu0
    %v993 = vadd.f32 %v924, %v992
    %v994 = vpop.f32.mrf.mxu0
    %995 = vmatprep.mubr.f32.mxu0 0.0
    %996 = vmatmul.mubr.f32.gmra.mxu0 %v902
    %v997 = vpop.f32.mrf.mxu0
    %v998 = vadd.f32 %v924, %v997
    %v999 = vpop.f32.mrf.mxu0
    %1000 = vdwg.mxu0
    %1001 = vst [vmem:[#allocation17] sm:$0xff] %v993
    %1002 = vst [vmem:[#allocation17 + $0x8] sm:$0xff] %v998
    // Predicated region
    $region106: #{tpu_custom_call.1} parent=1 // pred_check
      _
    $region107: #{tpu_custom_call.1} parent=1 // pred_check_branch
      %1004 = sbr.rel (0) target = $region109
    $region108: #{tpu_custom_call.1} parent=1 // pred_region
      %s1006 = ssub.s32 256, 256
      %1007 = vsyncadd [#allocation4], %s1006
      %s1008 = sshll.u32 [#allocation17], 4
      %s1009 = int_to_ptr.vmem [resolvable:$true] %s1008
      %1014 = dma.vmem_to_hbm [thread:$0]  %s1009, 256, %s17, [#allocation4], 128, 128, 8
    $region109: #{tpu_custom_call.1} parent=1 // pred_fallthru
      _
    // Predicated region
    $region110: #{tpu_custom_call.1} parent=1 // pred_check
      _
    $region111: #{tpu_custom_call.1} parent=1 // pred_check_branch
      %1016 = sbr.rel (0) target = $region113
    $region112: #{tpu_custom_call.1} parent=1 // pred_region
      %1017 = dma.done [#allocation4], 256
    $region113: #{tpu_custom_call.1} parent=1 // pred_fallthru
      _
    %1018 = vsyncpa [#allocation3], 1
    %1019 = vsyncpa [#allocation6], 1
    %1020 = vsyncpa [#allocation9], 1
    %1021 = vsyncpa [#allocation12], 1
    %1022 = vsyncpa [#allocation15], 1
    %1023 = vsyncpa [#allocation4], 1

</llo_original>
